<compile_context>
chip_gen: v7x
topology: tpu7x:2x2x1
jax: 0.10.0
libtpu: 0.0.40
codegen_flags: <defaults>
</compile_context>

<pallas_src>
import functools

import jax
import jax.numpy as jnp
from jax import lax
from jax.experimental import pallas as pl
from jax.experimental.pallas import tpu as pltpu


# ---------------------------------------------------------------------------
# Kernels
# ---------------------------------------------------------------------------
def _gconv1_kernel(a_ref, h0_ref, w1_ref, b1_ref, h1_ref):
    # H1[tile] = ReLU((A[tile, :] @ H0) @ W1 + b1)
    ah0 = jnp.dot(a_ref[...], h0_ref[...].astype(jnp.bfloat16),
                  preferred_element_type=jnp.float32)            # (tm, d0) f32
    h1 = jnp.dot(ah0.astype(jnp.bfloat16), w1_ref[...].astype(jnp.bfloat16),
                 preferred_element_type=jnp.float32) + b1_ref[...]
    h1_ref[...] = jnp.maximum(h1, 0.0)


def _gconv2_kernel(a_ref, h1_ref, w2_ref, b2_ref, eps_ref, out_ref, *, d2):
    # Fused mean/std heads on AH1[tile] = A[tile, :] @ H1, then reparametrize.
    ah1 = jnp.dot(a_ref[...], h1_ref[...].astype(jnp.bfloat16),
                  preferred_element_type=jnp.float32)            # (tm, d1) f32
    h2 = jnp.dot(ah1.astype(jnp.bfloat16), w2_ref[...].astype(jnp.bfloat16),
                 preferred_element_type=jnp.float32) + b2_ref[...]  # (tm, 2*d2)
    h2_mean = h2[:, :d2]
    h2_std = h2[:, d2:]
    latent = eps_ref[...] * jnp.exp(h2_std) + h2_mean
    # lane-dense slab [latent | mean | std], split in the wrapper
    out_ref[...] = jnp.concatenate([latent, h2_mean, h2_std], axis=-1)


def _decoder_kernel(zr_ref, zc_ref, recon_ref):
    # inner-product decoder tile: sigmoid(Z[i] @ Z[j]^T), trans-B on the MXU
    # TODO(synk): GraphConstruction(...).middle() is undefined in the source
    # module; the standard (V)GAE inner-product decoder is used here.
    logits = lax.dot_general(
        zr_ref[...].astype(jnp.bfloat16), zc_ref[...].astype(jnp.bfloat16),
        (((1,), (1,)), ((), ())), preferred_element_type=jnp.float32)
    recon_ref[...] = pl.reciprocal(1.0 + jnp.exp(-logits), approx=True)


# ---------------------------------------------------------------------------
# Wrapper
# ---------------------------------------------------------------------------
def _pick_row_tile(n):
    # biggest multiple-of-8 divisor of n (<=512) that still yields >=2 tiles,
    # so both v7x TensorCores get work; fall back to the full extent.
    for t in (512, 256, 128, 64, 32, 16, 8):
        if n % t == 0 and n // t >= 2:
            return t
    return n


def _pick_col_tile(n):
    # decoder output column tile: multiple of 128 (unmasked vst) or full n
    if n % 128 != 0:
        return n
    for t in (512, 256, 128):
        if n % t == 0:
            return t
    return n


def vgae_forward(A, H0, params, eps):
    N, d0 = H0.shape
    d1 = params["W1"].shape[1]
    d2 = params["W2m"].shape[1]

    tm = _pick_row_tile(N)
    tn = _pick_col_tile(N)

    # cast A once; it is read by both encoder stages (halves its HBM traffic)
    A_bf = A.astype(jnp.bfloat16)

    # fuse the two second-layer heads into one matmul
    w2 = jnp.concatenate([params["W2m"], params["W2s"]], axis=1)   # (d1, 2*d2)
    b2 = jnp.concatenate([params["b2m"], params["b2s"]], axis=1)   # (1, 2*d2)

    cparams_1d = pltpu.CompilerParams(
        dimension_semantics=("parallel",), vmem_limit_bytes=32 << 20)
    cparams_2d = pltpu.CompilerParams(
        dimension_semantics=("parallel", "parallel"), vmem_limit_bytes=32 << 20)

    # ---- stage 1: H1 = ReLU((A @ H0) @ W1 + b1) ----
    h1 = pl.pallas_call(
        _gconv1_kernel,
        out_shape=jax.ShapeDtypeStruct((N, d1), jnp.float32),
        grid=(N // tm,),
        in_specs=[
            pl.BlockSpec((tm, N), lambda i: (i, 0)),
            pl.BlockSpec((N, d0), lambda i: (0, 0)),
            pl.BlockSpec((d0, d1), lambda i: (0, 0)),
            pl.BlockSpec((1, d1), lambda i: (0, 0)),
        ],
        out_specs=pl.BlockSpec((tm, d1), lambda i: (i, 0)),
        compiler_params=cparams_1d,
    )(A_bf, H0, params["W1"], params["b1"])

    # ---- stage 2: fused mean/std heads + reparametrization ----
    slab = pl.pallas_call(
        functools.partial(_gconv2_kernel, d2=d2),
        out_shape=jax.ShapeDtypeStruct((N, 3 * d2), jnp.float32),
        grid=(N // tm,),
        in_specs=[
            pl.BlockSpec((tm, N), lambda i: (i, 0)),
            pl.BlockSpec((N, d1), lambda i: (0, 0)),
            pl.BlockSpec((d1, 2 * d2), lambda i: (0, 0)),
            pl.BlockSpec((1, 2 * d2), lambda i: (0, 0)),
            pl.BlockSpec((tm, d2), lambda i: (i, 0)),
        ],
        out_specs=pl.BlockSpec((tm, 3 * d2), lambda i: (i, 0)),
        compiler_params=cparams_1d,
    )(A_bf, h1, w2, b2, eps)

    latent = slab[:, :d2]
    h2_mean = slab[:, d2:2 * d2]
    h2_std = slab[:, 2 * d2:]

    # ---- stage 3: inner-product decoder, 2-D tiled ----
    recon = pl.pallas_call(
        _decoder_kernel,
        out_shape=jax.ShapeDtypeStruct((N, N), jnp.float32),
        grid=(N // tm, N // tn),
        in_specs=[
            pl.BlockSpec((tm, d2), lambda i, j: (i, 0)),
            pl.BlockSpec((tn, d2), lambda i, j: (j, 0)),
        ],
        out_specs=pl.BlockSpec((tm, tn), lambda i, j: (i, j)),
        compiler_params=cparams_2d,
    )(latent, latent)

    return latent, recon, h2_mean, h2_std


# ---------------------------------------------------------------------------
# Reference (pure JAX, f32) and init helpers
# ---------------------------------------------------------------------------
def vgae_reference(A, H0, params, eps):
    ah0 = A @ H0
    h1 = jnp.maximum(ah0 @ params["W1"] + params["b1"], 0.0)
    ah1 = A @ h1
    mean = ah1 @ params["W2m"] + params["b2m"]
    std = ah1 @ params["W2s"] + params["b2s"]
    latent = eps * jnp.exp(std) + mean
    recon = jax.nn.sigmoid(latent @ latent.T)
    return latent, recon, mean, std


def get_weight_initial(key, d_in, d_out):
    # deterministic Glorot-style uniform init (mirrors get_weight_initial),
    # stored as (in, out) so the kernel does X @ W.
    bound = jnp.sqrt(6.0 / (d_in + d_out))
    return jax.random.uniform(key, (d_in, d_out), jnp.float32, -bound, bound)


if __name__ == "__main__":
    N, d0, d1, d2 = 128, 32, 32, 16

    key = jax.random.PRNGKey(0)
    k_a, k_h, k_w1, k_w2m, k_w2s, k_eps = jax.random.split(key, 6)

    # symmetric normalized-adjacency-like matrix
    A_raw = jax.random.uniform(k_a, (N, N), jnp.float32)
    A = (A_raw + A_raw.T) / (2.0 * N)

    H0 = jax.random.normal(k_h, (N, d0), jnp.float32)

    params = {
        "W1": get_weight_initial(k_w1, d0, d1),
        "b1": jnp.zeros((1, d1), jnp.float32),
        "W2m": get_weight_initial(k_w2m, d1, d2),
        "b2m": jnp.zeros((1, d2), jnp.float32),
        "W2s": get_weight_initial(k_w2s, d1, d2),
        "b2s": jnp.zeros((1, d2), jnp.float32),
    }

    # eps ~ N(0, 1) for the reparametrization trick (torch.randn_like)
    eps = jax.random.normal(k_eps, (N, d2), jnp.float32)

    latent, recon, h2_mean, h2_std = vgae_forward(A, H0, params, eps)
    jax.block_until_ready((latent, recon, h2_mean, h2_std))

    # shape / sanity checks
    assert latent.shape == (N, d2)
    assert recon.shape == (N, N)
    assert h2_mean.shape == (N, d2)
    assert h2_std.shape == (N, d2)
    assert bool(jnp.all(jnp.isfinite(latent)))
    assert bool(jnp.all((recon >= -1e-3) & (recon <= 1.0 + 1e-3)))

    # numerical check against a pure-JAX f32 reference (tolerances account for
    # bf16 MXU inputs and the approx reciprocal in the sigmoid)
    lat_r, rec_r, mean_r, std_r = vgae_reference(A, H0, params, eps)
    assert float(jnp.max(jnp.abs(h2_mean - mean_r))) < 1e-2
    assert float(jnp.max(jnp.abs(h2_std - std_r))) < 1e-2
    assert float(jnp.max(jnp.abs(latent - lat_r))) < 1e-2
    assert float(jnp.max(jnp.abs(recon - rec_r))) < 1e-1

    print("KERNEL_OK")
</pallas_src>

<mosaic_0001>
module attributes {stable_mosaic.version = 11 : i64} {
  func.func @_gconv1_kernel(%arg0: i32, %arg1: memref<64x128xbf16, #tpu.memory_space<vmem>>, %arg2: memref<128x32xf32, #tpu.memory_space<vmem>>, %arg3: memref<32x32xf32, #tpu.memory_space<vmem>>, %arg4: memref<1x32xf32, #tpu.memory_space<vmem>>, %arg5: memref<64x32xf32, #tpu.memory_space<vmem>>) attributes {dimension_semantics = [#tpu.dimension_semantics<parallel>], iteration_bounds = array<i64: 2>, scalar_prefetch = 0 : i64, scratch_operands = 0 : i64, tpu.core_type = #tpu.core_type<tc>, window_params = [{transform_indices = @transform_0, window_bounds = array<i64: 64, 128>}, {pipeline_mode = #tpu.pipeline_mode<synchronous>, transform_indices = @transform_1, window_bounds = array<i64: 128, 32>}, {pipeline_mode = #tpu.pipeline_mode<synchronous>, transform_indices = @transform_2, window_bounds = array<i64: 32, 32>}, {pipeline_mode = #tpu.pipeline_mode<synchronous>, transform_indices = @transform_3, window_bounds = array<i64: 1, 32>}, {transform_indices = @transform_4, window_bounds = array<i64: 64, 32>}]} {
    %c0 = arith.constant 0 : index
    %c0_0 = arith.constant 0 : index
    %0 = vector.load %arg1[%c0, %c0_0] : memref<64x128xbf16, #tpu.memory_space<vmem>>, vector<64x128xbf16>
    %c0_1 = arith.constant 0 : index
    %c0_2 = arith.constant 0 : index
    %1 = vector.load %arg2[%c0_1, %c0_2] : memref<128x32xf32, #tpu.memory_space<vmem>>, vector<128x32xf32>
    %2 = arith.truncf %1 : vector<128x32xf32> to vector<128x32xbf16>
    %cst = arith.constant dense<0.000000e+00> : vector<64x32xf32>
    %3 = tpu.matmul %0, %2, %cst {dimension_numbers = #tpu.dot_dimension_numbers<[1], [0], [0], [1], [0, 0, 1, 1], [], []>} : vector<64x128xbf16>, vector<128x32xbf16>, vector<64x32xf32> -> vector<64x32xf32>
    %4 = arith.truncf %3 : vector<64x32xf32> to vector<64x32xbf16>
    %c0_3 = arith.constant 0 : index
    %c0_4 = arith.constant 0 : index
    %5 = vector.load %arg3[%c0_3, %c0_4] : memref<32x32xf32, #tpu.memory_space<vmem>>, vector<32x32xf32>
    %6 = arith.truncf %5 : vector<32x32xf32> to vector<32x32xbf16>
    %cst_5 = arith.constant dense<0.000000e+00> : vector<64x32xf32>
    %7 = tpu.matmul %4, %6, %cst_5 {dimension_numbers = #tpu.dot_dimension_numbers<[1], [0], [0], [1], [0, 0, 1, 1], [], []>} : vector<64x32xbf16>, vector<32x32xbf16>, vector<64x32xf32> -> vector<64x32xf32>
    %c0_6 = arith.constant 0 : index
    %c0_7 = arith.constant 0 : index
    %8 = vector.load %arg4[%c0_6, %c0_7] : memref<1x32xf32, #tpu.memory_space<vmem>>, vector<1x32xf32>
    %9 = vector.broadcast %8 : vector<1x32xf32> to vector<64x32xf32>
    %10 = arith.addf %7, %9 : vector<64x32xf32>
    %cst_8 = arith.constant 0.000000e+00 : f32
    %11 = vector.broadcast %cst_8 : f32 to vector<64x32xf32>
    %12 = arith.maximumf %10, %11 : vector<64x32xf32>
    %c0_9 = arith.constant 0 : index
    %c0_10 = arith.constant 0 : index
    %13 = vector.load %arg5[%c0_9, %c0_10] : memref<64x32xf32, #tpu.memory_space<vmem>>, vector<64x32xf32>
    tpu.vector_store %arg5[%c0_9, %c0_10], %12 {strides = array<i32>} : memref<64x32xf32, #tpu.memory_space<vmem>>, vector<64x32xf32>,
    return
  }
  func.func @transform_0(%arg0: i32) -> (i32, i32) {
    %c0_i32 = arith.constant 0 : i32
    %c0_i32_0 = arith.constant 0 : i32
    return %arg0, %c0_i32 : i32, i32
  }
  func.func @transform_1(%arg0: i32) -> (i32, i32) {
    %c0_i32 = arith.constant 0 : i32
    %c0_i32_0 = arith.constant 0 : i32
    %c0_i32_1 = arith.constant 0 : i32
    return %c0_i32, %c0_i32_0 : i32, i32
  }
  func.func @transform_2(%arg0: i32) -> (i32, i32) {
    %c0_i32 = arith.constant 0 : i32
    %c0_i32_0 = arith.constant 0 : i32
    %c0_i32_1 = arith.constant 0 : i32
    return %c0_i32, %c0_i32_0 : i32, i32
  }
  func.func @transform_3(%arg0: i32) -> (i32, i32) {
    %c0_i32 = arith.constant 0 : i32
    %c0_i32_0 = arith.constant 0 : i32
    %c0_i32_1 = arith.constant 0 : i32
    return %c0_i32, %c0_i32_0 : i32, i32
  }
  func.func @transform_4(%arg0: i32) -> (i32, i32) {
    %c0_i32 = arith.constant 0 : i32
    %c0_i32_0 = arith.constant 0 : i32
    return %arg0, %c0_i32 : i32, i32
  }
}

</mosaic_0001>

<llo_original>
// kernel: tpu_custom_call.1
$region0: #{tpu_custom_call.1}
  #allocation0 [shape = 'u32[]', space=smem, size = 0x4, offset = 0x4, fixed_abs, tag = 'smem constant byte address 0x4 - core index']
  #allocation1 [shape = 'u32[144,128]{1,0:T(1,128)}', space=vmem, size = 0x12000, scoped, tag = 'internal scratch']
  %s0 = inlined_call_operand.vmem [shape: bf16[128,128], index: 0, kind: input, shape index: {}]
  %s1 = inlined_call_operand.vmem [shape: f32[128,32], index: 1, kind: input, shape index: {}]
  %s2 = inlined_call_operand.vmem [shape: f32[32,32], index: 2, kind: input, shape index: {}]
  %s3 = inlined_call_operand.vmem [shape: f32[1,32], index: 3, kind: input, shape index: {}]
  %s4 = inlined_call_operand.vmem [shape: f32[128,32], index: 4, kind: output, shape index: {}]
  %s5 = sld [smem:[#allocation0]]
  $region49: #{tpu_custom_call.1} parent=0
    _
  %s7 = ssub.s32 1, %s5
  %s8 = scalar_select 0, %s7, %s5
  loop: start=0, step=1, limit=4
  $region2: #{tpu_custom_call.1} parent=0 // loop_pre_header
    _
  $region3: #{tpu_custom_call.1} parent=0 // loop_header
    %s10 = sphi 0, %s14
    %p11 = scmp.ge.s32.totalorder %s10, 4
    %s20 = sphi 0, %s22
    %s23 = sphi 0, %s20
    %s24 = sphi 0, %s23
    %s40 = sphi 0, %s24
    %s44 = sphi 0, %s44
    %s46 = sphi 0, %s44
    %s47 = sphi 0, %s46
    %s61 = sphi 0, %s47
    %s65 = sphi 0, %s65
    %s67 = sphi 0, %s65
    %s68 = sphi 0, %s67
    %s82 = sphi 0, %s68
    %s86 = sphi 0, %s86
    %s88 = sphi 0, %s86
    %s89 = sphi 0, %s88
    %s103 = sphi 0, %s89
    %s109 = sphi 0, %s111
    %s112 = sphi 0, %s109
    %s113 = sphi 0, %s112
    %s129 = sphi 0, %s113
  $region4: #{tpu_custom_call.1} parent=0 // loop_header_branch
    %13 = sbr.rel (%p11) target = $region8
  $region5: #{tpu_custom_call.1} parent=0 // loop_body
    %s15 = ssub.s32 %s10, 1
    %s16 = ssub.s32 %s10, 2
    %s17 = sadd.s32 %s10, 1
    %s18 = ssub.s32 %s10, %s17
    %p19 = scmp.eq.s32.totalorder %s18, 0
    %s21 = sadd.s32 %s20, 1
    %s22 = scalar_select %p19, %s20, %s21
    %p25 = pneg %p19
    %p26 = scmp.eq.s32.totalorder %s10, 1
    %p27 = por %p25, %p26
    %p28 = scmp.ne.s32.totalorder %s20, %s23
    %p29 = scmp.eq.s32.totalorder %s10, 0
    %p30 = por %p28, %p29
    %p31 = scmp.ne.s32.totalorder %s20, %s23
    %p32 = scmp.eq.s32.totalorder %s15, 1
    %p33 = por %p31, %p32
    %p34 = scmp.ne.s32.totalorder %s23, %s24
    %p35 = scmp.eq.s32.totalorder %s15, 0
    %p36 = por %p34, %p35
    %p37 = scmp.ne.s32.totalorder %s23, %s24
    %p38 = scmp.eq.s32.totalorder %s16, 1
    %p39 = por %p37, %p38
    %p41 = scmp.ne.s32.totalorder %s24, %s40
    %p42 = scmp.eq.s32.totalorder %s16, 0
    %p43 = por %p41, %p42
    %s45 = sadd.s32 %s44, 1
    %p48 = scmp.eq.s32.totalorder %s10, 1
    %p49 = scmp.ne.s32.totalorder %s44, %s46
    %p50 = scmp.eq.s32.totalorder %s10, 0
    %p51 = por %p49, %p50
    %p52 = scmp.ne.s32.totalorder %s44, %s46
    %p53 = scmp.eq.s32.totalorder %s15, 1
    %p54 = por %p52, %p53
    %p55 = scmp.ne.s32.totalorder %s46, %s47
    %p56 = scmp.eq.s32.totalorder %s15, 0
    %p57 = por %p55, %p56
    %p58 = scmp.ne.s32.totalorder %s46, %s47
    %p59 = scmp.eq.s32.totalorder %s16, 1
    %p60 = por %p58, %p59
    %p62 = scmp.ne.s32.totalorder %s47, %s61
    %p63 = scmp.eq.s32.totalorder %s16, 0
    %p64 = por %p62, %p63
    %s66 = sadd.s32 %s65, 1
    %p69 = scmp.eq.s32.totalorder %s10, 1
    %p70 = scmp.ne.s32.totalorder %s65, %s67
    %p71 = scmp.eq.s32.totalorder %s10, 0
    %p72 = por %p70, %p71
    %p73 = scmp.ne.s32.totalorder %s65, %s67
    %p74 = scmp.eq.s32.totalorder %s15, 1
    %p75 = por %p73, %p74
    %p76 = scmp.ne.s32.totalorder %s67, %s68
    %p77 = scmp.eq.s32.totalorder %s15, 0
    %p78 = por %p76, %p77
    %p79 = scmp.ne.s32.totalorder %s67, %s68
    %p80 = scmp.eq.s32.totalorder %s16, 1
    %p81 = por %p79, %p80
    %p83 = scmp.ne.s32.totalorder %s68, %s82
    %p84 = scmp.eq.s32.totalorder %s16, 0
    %p85 = por %p83, %p84
    %s87 = sadd.s32 %s86, 1
    %p90 = scmp.eq.s32.totalorder %s10, 1
    %p91 = scmp.ne.s32.totalorder %s86, %s88
    %p92 = scmp.eq.s32.totalorder %s10, 0
    %p93 = por %p91, %p92
    %p94 = scmp.ne.s32.totalorder %s86, %s88
    %p95 = scmp.eq.s32.totalorder %s15, 1
    %p96 = por %p94, %p95
    %p97 = scmp.ne.s32.totalorder %s88, %s89
    %p98 = scmp.eq.s32.totalorder %s15, 0
    %p99 = por %p97, %p98
    %p100 = scmp.ne.s32.totalorder %s88, %s89
    %p101 = scmp.eq.s32.totalorder %s16, 1
    %p102 = por %p100, %p101
    %p104 = scmp.ne.s32.totalorder %s89, %s103
    %p105 = scmp.eq.s32.totalorder %s16, 0
    %p106 = por %p104, %p105
    %s107 = ssub.s32 %s10, %s17
    %p108 = scmp.eq.s32.totalorder %s107, 0
    %s110 = sadd.s32 %s109, 1
    %s111 = scalar_select %p108, %s109, %s110
    %p114 = pneg %p108
    %p115 = scmp.eq.s32.totalorder %s10, 1
    %p116 = por %p114, %p115
    %p117 = scmp.ne.s32.totalorder %s109, %s112
    %p118 = scmp.eq.s32.totalorder %s10, 0
    %p119 = por %p117, %p118
    %p120 = scmp.ne.s32.totalorder %s109, %s112
    %p121 = scmp.eq.s32.totalorder %s15, 1
    %p122 = por %p120, %p121
    %p123 = scmp.ne.s32.totalorder %s112, %s113
    %p124 = scmp.eq.s32.totalorder %s15, 0
    %p125 = por %p123, %p124
    %p126 = scmp.ne.s32.totalorder %s112, %s113
    %p127 = scmp.eq.s32.totalorder %s16, 1
    %p128 = por %p126, %p127
    %p130 = scmp.ne.s32.totalorder %s113, %s129
    %p131 = scmp.eq.s32.totalorder %s16, 0
    %p132 = por %p130, %p131
    %p133 = scmp.le.s32.totalorder 1, %s10
    %p134 = scmp.lt.s32.totalorder %s10, 3
    %p135 = pnand %p133, %p134
    %p136 = pneg %p135
    // Predicated region
    $region9: #{tpu_custom_call.1} parent=5 // pred_check
      _
    $region10: #{tpu_custom_call.1} parent=5 // pred_check_branch
      %138 = sbr.rel (%p135) target = $region12
    $region11: #{tpu_custom_call.1} parent=5 // pred_region
      %s139 = ssub.s32 %s10, 1
      // Predicated region
      $region13: #{tpu_custom_call.1} parent=11 // pred_check
        %p140 = pneg %p57
      $region14: #{tpu_custom_call.1} parent=11 // pred_check_branch
        %142 = sbr.rel (%p140) target = $region16
      $region15: #{tpu_custom_call.1} parent=11 // pred_region
        _
      $region16: #{tpu_custom_call.1} parent=11 // pred_fallthru
        _
      // Predicated region
      $region17: #{tpu_custom_call.1} parent=11 // pred_check
        %p143 = pneg %p78
      $region18: #{tpu_custom_call.1} parent=11 // pred_check_branch
        %145 = sbr.rel (%p143) target = $region20
      $region19: #{tpu_custom_call.1} parent=11 // pred_region
        _
      $region20: #{tpu_custom_call.1} parent=11 // pred_fallthru
        _
      // Predicated region
      $region21: #{tpu_custom_call.1} parent=11 // pred_check
        %p146 = pneg %p99
      $region22: #{tpu_custom_call.1} parent=11 // pred_check_branch
        %148 = sbr.rel (%p146) target = $region24
      $region23: #{tpu_custom_call.1} parent=11 // pred_region
        _
      $region24: #{tpu_custom_call.1} parent=11 // pred_fallthru
        _
    $region12: #{tpu_custom_call.1} parent=5 // pred_fallthru
      _
    %p149 = scmp.lt.s32.totalorder %s10, 2
    // Predicated region
    $region25: #{tpu_custom_call.1} parent=5 // pred_check
      %p150 = pneg %p149
    $region26: #{tpu_custom_call.1} parent=5 // pred_check_branch
      %152 = sbr.rel (%p150) target = $region28
    $region27: #{tpu_custom_call.1} parent=5 // pred_region
      // Predicated region
      $region29: #{tpu_custom_call.1} parent=27 // pred_check
        %p153 = pneg %p30
      $region30: #{tpu_custom_call.1} parent=27 // pred_check_branch
        %155 = sbr.rel (%p153) target = $region32
      $region31: #{tpu_custom_call.1} parent=27 // pred_region
        %s156 = smul.u32 8, %s10
        %p157 = scmp.lt.s32.totalorder %s156, 15
        %s158 = scalar_select %p157, %s156, 15
        %s159 = smul.addr %s158, 4
        %s160 = scalar_lea.vmem %s0, %s159
        %s161 = smul.u32 8, %s10
      $region32: #{tpu_custom_call.1} parent=27 // pred_fallthru
        _
    $region28: #{tpu_custom_call.1} parent=5 // pred_fallthru
      _
    %p162 = scmp.le.s32.totalorder 1, %s10
    %p163 = scmp.lt.s32.totalorder %s10, 3
    %p164 = pnand %p162, %p163
    %p165 = pneg %p164
    // Predicated region
    $region33: #{tpu_custom_call.1} parent=5 // pred_check
      _
    $region34: #{tpu_custom_call.1} parent=5 // pred_check_branch
      %167 = sbr.rel (%p164) target = $region36
    $region35: #{tpu_custom_call.1} parent=5 // pred_region
      %s168 = ssub.s32 %s10, 1
      %s169 = smul.u32 8, %s15
      %p170 = scmp.lt.s32.totalorder %s169, 15
      %s171 = scalar_select %p170, %s169, 15
      %s172 = smul.addr %s171, 4
      %s173 = scalar_lea.vmem %s0, %s172
      %p174 = pneg %p36
      %p175 = pneg %p33
      %p176 = pneg %p57
      %p177 = pneg %p54
      %p178 = pneg %p78
      %p179 = pneg %p75
      %p180 = pneg %p99
      %p181 = pneg %p96
      %p182 = pneg %p125
      %p183 = pneg %p122
      %s184 = smul.u32 8, %s15
      %p185 = scmp.lt.s32.totalorder %s184, 15
      %s186 = scalar_select %p185, %s184, 15
      %s187 = smul.addr %s186, 8
      %s188 = scalar_lea.vmem %s4, %s187
      %s189 = smul.u32 8, %s15
      %p190 = scmp.lt.s32.totalorder %s189, 15
      %s191 = scalar_select %p190, %s189, 15
      %s192 = smul.addr %s191, 4
      %s193 = scalar_lea.vmem %s0, %s192
      %s194 = smul.u32 8, %s15
      %s195 = smul.u32 8, %s15
      %p196 = scmp.lt.s32.totalorder %s195, 15
      %s197 = scalar_select %p196, %s195, 15
      %s198 = smul.addr %s197, 8
      %s199 = scalar_lea.vmem %s4, %s198
      %s200 = smul.u32 8, %s15
      %v202 = vld [vmem:[%s193] sm:$0xf]
      %v203 = vld [vmem:[%s193 + $0x4] sm:$0xf]
      %v204 = vld [vmem:[%s193 + $0x8] sm:$0xf]
      %v205 = vld [vmem:[%s193 + $0xc] sm:$0xf]
      %v206 = vld [vmem:[%s193 + $0x10] sm:$0xf]
      %v207 = vld [vmem:[%s193 + $0x14] sm:$0xf]
      %v208 = vld [vmem:[%s193 + $0x18] sm:$0xf]
      %v209 = vld [vmem:[%s193 + $0x1c] sm:$0xf]
      %v210 = vld [vmem:[%s1] sm:$0xff]
      %v211 = vld [vmem:[%s1 + $0x8] sm:$0xff]
      %v212 = vld [vmem:[%s1 + $0x10] sm:$0xff]
      %v213 = vld [vmem:[%s1 + $0x18] sm:$0xff]
      %v214 = vld [vmem:[%s1 + $0x20] sm:$0xff]
      %v215 = vld [vmem:[%s1 + $0x28] sm:$0xff]
      %v216 = vld [vmem:[%s1 + $0x30] sm:$0xff]
      %v217 = vld [vmem:[%s1 + $0x38] sm:$0xff]
      %v218 = vld [vmem:[%s1 + $0x40] sm:$0xff]
      %v219 = vld [vmem:[%s1 + $0x48] sm:$0xff]
      %v220 = vld [vmem:[%s1 + $0x50] sm:$0xff]
      %v221 = vld [vmem:[%s1 + $0x58] sm:$0xff]
      %v222 = vld [vmem:[%s1 + $0x60] sm:$0xff]
      %v223 = vld [vmem:[%s1 + $0x68] sm:$0xff]
      %v224 = vld [vmem:[%s1 + $0x70] sm:$0xff]
      %v225 = vld [vmem:[%s1 + $0x78] sm:$0xff]
      %v226 = vpack.c.bf16 %v211, %v210
      %v227 = vpack.c.bf16 %v213, %v212
      %v228 = vpack.c.bf16 %v215, %v214
      %v229 = vpack.c.bf16 %v217, %v216
      %v230 = vpack.c.bf16 %v219, %v218
      %v231 = vpack.c.bf16 %v221, %v220
      %v232 = vpack.c.bf16 %v223, %v222
      %v233 = vpack.c.bf16 %v225, %v224
      %v242 = vunpack.c.l.b16 %v202
      %v243 = vunpack.c.l.b16 %v203
      %v244 = vunpack.c.l.b16 %v204
      %v245 = vunpack.c.l.b16 %v205
      %v246 = vunpack.c.l.b16 %v206
      %v247 = vunpack.c.l.b16 %v207
      %v248 = vunpack.c.l.b16 %v208
      %v249 = vunpack.c.l.b16 %v209
      %v250 = vpack.c.b16 %v243, %v242
      %v251 = vpack.c.b16 %v245, %v244
      %v252 = vpack.c.b16 %v247, %v246
      %v253 = vpack.c.b16 %v249, %v248
      %258 = vmatprep.subr.bf16.mxu0 0
      %259 = vmatpush1.bf16.msra.mxu0 %v226
      %260 = vmatprep.subr.bf16.mxu0 0
      %261 = vmatpush1.bf16.msra.mxu0 %v227
      %262 = vmatprep.subr.bf16.mxu0 0
      %263 = vmatpush1.bf16.msra.mxu0 %v228
      %264 = vmatprep.subr.bf16.mxu0 0
      %265 = vmatpush1.bf16.msra.mxu0 %v229
      %266 = vmatprep.subr.bf16.mxu0 0
      %267 = vmatpush1.bf16.msra.mxu0 %v230
      %268 = vmatprep.subr.bf16.mxu0 0
      %269 = vmatpush1.bf16.msra.mxu0 %v231
      %270 = vmatprep.subr.bf16.mxu0 0
      %271 = vmatpush1.bf16.msra.mxu0 %v232
      %272 = vmatprep.subr.bf16.mxu0 0
      %273 = vmatpush1.bf16.msra.mxu0 %v233
      %274 = vmatprep.subr.bf16.mxu0 0
      %275 = vmatpush1.bf16.msra.mxu0 0
      %276 = vmatprep.subr.bf16.mxu0 0
      %277 = vmatpush1.bf16.msra.mxu0 0
      %278 = vmatprep.subr.bf16.mxu0 0
      %279 = vmatpush1.bf16.msra.mxu0 0
      %280 = vmatprep.subr.bf16.mxu0 0
      %281 = vmatpush1.bf16.msra.mxu0 0
      %282 = vmatprep.subr.bf16.mxu0 0
      %283 = vmatpush1.bf16.msra.mxu0 0
      %284 = vmatprep.subr.bf16.mxu0 0
      %285 = vmatpush1.bf16.msra.mxu0 0
      %286 = vmatprep.subr.bf16.mxu0 0
      %287 = vmatpush1.bf16.msra.mxu0 0
      %288 = vmatprep.subr.bf16.mxu0 0
      %289 = vmatpush1.bf16.msra.mxu0 0
      %290 = vmatprep.mubr.bf16.mxu0 0
      %291 = vmatmul.mubr.bf16.gmra.mrb[0].mxu0 %v250
      %v292 = vpop.f32.mrb[0].mxu0
      %v293 = vadd.f32 0.0, %v292
      %v294 = vpop.f32.mrb[0].mxu0
      %v295 = vpop.f32.mrb[0].mxu0
      %v296 = vadd.f32 0.0, %v295
      %v297 = vpop.f32.mrb[0].mxu0
      %298 = vmatprep.mubr.bf16.mxu0 0
      %299 = vmatmul.mubr.bf16.gmra.mrb[0].mxu0 %v251
      %v300 = vpop.f32.mrb[0].mxu0
      %v301 = vadd.f32 0.0, %v300
      %v302 = vpop.f32.mrb[0].mxu0
      %v303 = vpop.f32.mrb[0].mxu0
      %v304 = vadd.f32 0.0, %v303
      %v305 = vpop.f32.mrb[0].mxu0
      %306 = vmatprep.mubr.bf16.mxu0 0
      %307 = vmatmul.mubr.bf16.gmra.mrb[0].mxu0 %v252
      %v308 = vpop.f32.mrb[0].mxu0
      %v309 = vadd.f32 0.0, %v308
      %v310 = vpop.f32.mrb[0].mxu0
      %v311 = vpop.f32.mrb[0].mxu0
      %v312 = vadd.f32 0.0, %v311
      %v313 = vpop.f32.mrb[0].mxu0
      %314 = vmatprep.mubr.bf16.mxu0 0
      %315 = vmatmul.mubr.bf16.gmra.mrb[0].mxu0 %v253
      %v316 = vpop.f32.mrb[0].mxu0
      %v317 = vadd.f32 0.0, %v316
      %v318 = vpop.f32.mrb[0].mxu0
      %v319 = vpop.f32.mrb[0].mxu0
      %v320 = vadd.f32 0.0, %v319
      %v321 = vpop.f32.mrb[0].mxu0
      %322 = vdwg.mxu0
      %v323 = vpack.c.bf16 %v296, %v293
      %v324 = vpack.c.bf16 %v304, %v301
      %v325 = vpack.c.bf16 %v312, %v309
      %v326 = vpack.c.bf16 %v320, %v317
      %v327 = vld [vmem:[%s2] sm:$0xff]
      %v328 = vld [vmem:[%s2 + $0x8] sm:$0xff]
      %v329 = vld [vmem:[%s2 + $0x10] sm:$0xff]
      %v330 = vld [vmem:[%s2 + $0x18] sm:$0xff]
      %v331 = vpack.c.bf16 %v328, %v327
      %v332 = vpack.c.bf16 %v330, %v329
      %v333 = vld [vmem:[%s3] sm:$0x1]
      %v335 = vlaneseq
      %v336 = vshrl.u32 %v335, 7
      %v337 = vsub.s32 0, %v336
      %v338 = vrot.slane %v333, %v337
      %vm340 = vcmask 261120
      %v342 = vsel %vm340, %v323, 0
      %v345 = vsel %vm340, %v324, 0
      %v348 = vsel %vm340, %v325, 0
      %v351 = vsel %vm340, %v326, 0
      %353 = vmatprep.subr.bf16.mxu0 0
      %354 = vmatpush1.bf16.msra.mxu0 %v331
      %355 = vmatprep.subr.bf16.mxu0 0
      %356 = vmatpush1.bf16.msra.mxu0 %v332
      %357 = vmatprep.subr.bf16.mxu0 0
      %358 = vmatpush1.bf16.msra.mxu0 0
      %359 = vmatprep.subr.bf16.mxu0 0
      %360 = vmatpush1.bf16.msra.mxu0 0
      %361 = vmatprep.subr.bf16.mxu0 0
      %362 = vmatpush1.bf16.msra.mxu0 0
      %363 = vmatprep.subr.bf16.mxu0 0
      %364 = vmatpush1.bf16.msra.mxu0 0
      %365 = vmatprep.subr.bf16.mxu0 0
      %366 = vmatpush1.bf16.msra.mxu0 0
      %367 = vmatprep.subr.bf16.mxu0 0
      %368 = vmatpush1.bf16.msra.mxu0 0
      %369 = vmatprep.subr.bf16.mxu0 0
      %370 = vmatpush1.bf16.msra.mxu0 0
      %371 = vmatprep.subr.bf16.mxu0 0
      %372 = vmatpush1.bf16.msra.mxu0 0
      %373 = vmatprep.subr.bf16.mxu0 0
      %374 = vmatpush1.bf16.msra.mxu0 0
      %375 = vmatprep.subr.bf16.mxu0 0
      %376 = vmatpush1.bf16.msra.mxu0 0
      %377 = vmatprep.subr.bf16.mxu0 0
      %378 = vmatpush1.bf16.msra.mxu0 0
      %379 = vmatprep.subr.bf16.mxu0 0
      %380 = vmatpush1.bf16.msra.mxu0 0
      %381 = vmatprep.subr.bf16.mxu0 0
      %382 = vmatpush1.bf16.msra.mxu0 0
      %383 = vmatprep.subr.bf16.mxu0 0
      %384 = vmatpush1.bf16.msra.mxu0 0
      %385 = vmatprep.mubr.bf16.mxu0 0
      %386 = vmatmul.mubr.bf16.gmra.mrb[0].mxu0 %v342
      %v387 = vpop.f32.mrb[0].mxu0
      %v388 = vadd.f32 %v338, %v387
      %v389 = vpop.f32.mrb[0].mxu0
      %v390 = vpop.f32.mrb[0].mxu0
      %v391 = vadd.f32 %v338, %v390
      %v392 = vpop.f32.mrb[0].mxu0
      %393 = vmatprep.mubr.bf16.mxu0 0
      %394 = vmatmul.mubr.bf16.gmra.mrb[0].mxu0 %v345
      %v395 = vpop.f32.mrb[0].mxu0
      %v396 = vadd.f32 %v338, %v395
      %v397 = vpop.f32.mrb[0].mxu0
      %v398 = vpop.f32.mrb[0].mxu0
      %v399 = vadd.f32 %v338, %v398
      %v400 = vpop.f32.mrb[0].mxu0
      %401 = vmatprep.mubr.bf16.mxu0 0
      %402 = vmatmul.mubr.bf16.gmra.mrb[0].mxu0 %v348
      %v403 = vpop.f32.mrb[0].mxu0
      %v404 = vadd.f32 %v338, %v403
      %v405 = vpop.f32.mrb[0].mxu0
      %v406 = vpop.f32.mrb[0].mxu0
      %v407 = vadd.f32 %v338, %v406
      %v408 = vpop.f32.mrb[0].mxu0
      %409 = vmatprep.mubr.bf16.mxu0 0
      %410 = vmatmul.mubr.bf16.gmra.mrb[0].mxu0 %v351
      %v411 = vpop.f32.mrb[0].mxu0
      %v412 = vadd.f32 %v338, %v411
      %v413 = vpop.f32.mrb[0].mxu0
      %v414 = vpop.f32.mrb[0].mxu0
      %v415 = vadd.f32 %v338, %v414
      %v416 = vpop.f32.mrb[0].mxu0
      %417 = vdwg.mxu0
      %v418 = vmax.f32 %v388, 0.0
      %v419 = vmax.f32 %v391, 0.0
      %v420 = vmax.f32 %v396, 0.0
      %v421 = vmax.f32 %v399, 0.0
      %v422 = vmax.f32 %v404, 0.0
      %v423 = vmax.f32 %v407, 0.0
      %v424 = vmax.f32 %v412, 0.0
      %v425 = vmax.f32 %v415, 0.0
      %426 = vst.msk [vmem:[%s199] sm:$0xff] %vm340, %v418
      %427 = vst.msk [vmem:[%s199 + $0x8] sm:$0xff] %vm340, %v419
      %428 = vst.msk [vmem:[%s199 + $0x10] sm:$0xff] %vm340, %v420
      %429 = vst.msk [vmem:[%s199 + $0x18] sm:$0xff] %vm340, %v421
      %430 = vst.msk [vmem:[%s199 + $0x20] sm:$0xff] %vm340, %v422
      %431 = vst.msk [vmem:[%s199 + $0x28] sm:$0xff] %vm340, %v423
      %432 = vst.msk [vmem:[%s199 + $0x30] sm:$0xff] %vm340, %v424
      %433 = vst.msk [vmem:[%s199 + $0x38] sm:$0xff] %vm340, %v425
      %s434 = smul.u32 8, %s15
      %p435 = scmp.lt.s32.totalorder %s434, 15
      %s436 = scalar_select %p435, %s434, 15
      %s437 = smul.addr %s436, 8
      %s438 = scalar_lea.vmem %s4, %s437
      // Predicated region
      $region37: #{tpu_custom_call.1} parent=35 // pred_check
        %p439 = pneg %p122
      $region38: #{tpu_custom_call.1} parent=35 // pred_check_branch
        %441 = sbr.rel (%p439) target = $region40
      $region39: #{tpu_custom_call.1} parent=35 // pred_region
        %s442 = smul.u32 8, %s15
      $region40: #{tpu_custom_call.1} parent=35 // pred_fallthru
        _
    $region36: #{tpu_custom_call.1} parent=5 // pred_fallthru
      _
    %p443 = scmp.le.s32.totalorder 2, %s10
    // Predicated region
    $region41: #{tpu_custom_call.1} parent=5 // pred_check
      %p444 = pneg %p443
    $region42: #{tpu_custom_call.1} parent=5 // pred_check_branch
      %446 = sbr.rel (%p444) target = $region44
    $region43: #{tpu_custom_call.1} parent=5 // pred_region
      %s447 = ssub.s32 %s10, 2
      // Predicated region
      $region45: #{tpu_custom_call.1} parent=43 // pred_check
        %p448 = pneg %p128
      $region46: #{tpu_custom_call.1} parent=43 // pred_check_branch
        %450 = sbr.rel (%p448) target = $region48
      $region47: #{tpu_custom_call.1} parent=43 // pred_region
        %s451 = smul.u32 8, %s16
        %p452 = scmp.lt.s32.totalorder %s451, 15
        %s453 = scalar_select %p452, %s451, 15
        %s454 = smul.addr %s453, 8
        %s455 = scalar_lea.vmem %s4, %s454
      $region48: #{tpu_custom_call.1} parent=43 // pred_fallthru
        _
    $region44: #{tpu_custom_call.1} parent=5 // pred_fallthru
      _
  $region6: #{tpu_custom_call.1} parent=0 // loop_footer
    %s14 = sadd.s32 1, %s10
  $region7: #{tpu_custom_call.1} parent=0 // loop_footer_branch
    %9 = sbr.rel target = $region3
  $region8: #{tpu_custom_call.1} parent=0 // loop_exit
    _

</llo_original>
